<compile_context>
chip_gen: v6e
topology: v6e:2x2x1
jax: 0.10.0
libtpu: 0.0.40
codegen_flags: <defaults>
</compile_context>

<pallas_src>
import functools

import numpy as np
import jax
import jax.numpy as jnp
from jax import lax
from jax.experimental import pallas as pl
from jax.experimental.pallas import tpu as pltpu

LN_EPS = 1e-5  # torch.nn.LayerNorm default


def _round_up(x, m):
    return ((x + m - 1) // m) * m


def _vmem_budget_bytes():
    """Usable per-core VMEM budget with compiler headroom, per chip generation."""
    try:
        cap = int(pltpu.get_tpu_info().vmem_capacity_bytes)
    except Exception:  # interpret mode / query unavailable -> conservative default
        cap = 64 * 2 ** 20
    if cap <= 64 * 2 ** 20:
        # v7x-class: 64 MiB physical; leave ~20% for internal scratch / pipeline metadata.
        return int(cap * 0.8)
    # v5e / v6e: 128 MiB physical; allow ~100 MiB.
    return min(int(cap * 0.8), 100 * 2 ** 20)


def ffn_ln_kernel(x_ref, w1_ref, w2_ref, o_ref, acc_ref):
    # x_ref:  (tile, d_model)   row tile (input dtype)
    # w1_ref: (d_model, tkf)    weight chunk (or full, resident), MXU dtype
    # w2_ref: (tkf, d_model)    weight chunk (or full, resident), MXU dtype
    # acc_ref:(tile, d_model)   f32 accumulator scratch (lives across the d_ff axis)
    f = pl.program_id(1)
    nf = pl.num_programs(1)
    mxu_dtype = w1_ref.dtype

    @pl.when(f == 0)
    def _():
        acc_ref[...] = jnp.zeros_like(acc_ref)

    # Hidden chunk: relu(x @ w1_chunk).  ReLU + downcast fused so only the
    # narrow (MXU-dtype) copy of the (tile, tkf) hidden stays live into the
    # second matmul (halves the largest on-chip temporary).
    h = jnp.maximum(
        jnp.dot(x_ref[...].astype(mxu_dtype), w1_ref[...],
                preferred_element_type=jnp.float32),
        0.0,
    ).astype(mxu_dtype)
    acc_ref[...] += jnp.dot(h, w2_ref[...], preferred_element_type=jnp.float32)

    @pl.when(f == nf - 1)
    def _():
        # Residual + LayerNorm (gamma=1, beta=0, eps inside rsqrt), f32 math.
        y = acc_ref[...] + x_ref[...].astype(jnp.float32)
        mean = jnp.mean(y, axis=-1, keepdims=True)
        mean_sq = jnp.mean(y * y, axis=-1, keepdims=True)
        var = jnp.maximum(mean_sq - mean * mean, 0.0)  # one-pass variance
        o_ref[...] = ((y - mean) * lax.rsqrt(var + LN_EPS)).astype(o_ref.dtype)


@functools.partial(jax.jit, static_argnames=("tm",))
def poswise_ffn(x, w1_t, w2_t, *, tm=512):
    """x: [batch, seq, d_model]; w1_t: [d_model, d_ff]; w2_t: [d_ff, d_model].

    Pass w1_t / w2_t already cast to the MXU dtype (bf16 recommended); the
    kernel never re-casts the weight tiles.
    """
    b, s, d_model = x.shape
    d_ff = w1_t.shape[1]
    rows = b * s

    x_item = np.dtype(x.dtype).itemsize
    w_item = np.dtype(w1_t.dtype).itemsize
    sub = max(8, 32 // max(x_item, 1))  # sublane multiple: 8 f32 / 16 bf16 / 32 int8

    budget = _vmem_budget_bytes()

    # ---------------- row tile ----------------
    tile = min(tm, _round_up(rows, sub))
    # Guarantee >=2 steps along the parallel rows axis when possible so both
    # TensorCores get work on v7x (cheap: ~0.35us extra grid-step overhead).
    if rows <= tile and tile >= 2 * sub:
        tile = _round_up((tile + 1) // 2, sub)
    rows_p = _round_up(rows, tile)
    grid_rows = rows_p // tile

    x2d = x.reshape(rows, d_model)
    if rows_p != rows:
        x2d = jnp.pad(x2d, ((0, rows_p - rows), (0, 0)))

    # ---------------- d_ff chunking ----------------
    io_bytes = 2 * 2 * tile * d_model * x_item   # double-buffered in + out row tiles
    acc_bytes = tile * d_model * 4               # accumulator scratch
    ln_bytes = 3 * tile * d_model * 4            # residual / LN temporaries

    def _fits(tkf, nbuf):
        w_bytes = nbuf * 2 * d_model * tkf * w_item
        hid_bytes = tile * tkf * (4 + w_item)    # f32 matmul result + MXU-dtype copy
        return io_bytes + acc_bytes + ln_bytes + w_bytes + hid_bytes <= budget

    if d_ff % 128 != 0 or _fits(d_ff, 1):
        tkf, grid_ff = d_ff, 1                   # fully resident weights (single copy)
    else:
        cands = [c for c in range(128, d_ff + 1, 128) if d_ff % c == 0]
        tkf = next((c for c in reversed(cands) if _fits(c, 2)), cands[0])
        grid_ff = d_ff // tkf

    if grid_ff == 1:
        # Pin the whole weight arrays in VMEM once: no per-step pipelining, so
        # no wasted second buffer for blocks whose index never changes.
        w1_spec = pl.BlockSpec(memory_space=pltpu.MemorySpace.VMEM)
        w2_spec = pl.BlockSpec(memory_space=pltpu.MemorySpace.VMEM)
        w_resident_bytes = 2 * d_model * d_ff * w_item
    else:
        # Stream d_ff chunks (reduction axis last, double-buffered by default).
        w1_spec = pl.BlockSpec((d_model, tkf), lambda i, f: (0, f))
        w2_spec = pl.BlockSpec((tkf, d_model), lambda i, f: (f, 0))
        w_resident_bytes = 2 * 2 * d_model * tkf * w_item

    footprint = (io_bytes + acc_bytes + ln_bytes + w_resident_bytes
                 + tile * tkf * (4 + w_item))
    vmem_limit = int(min(max(int(footprint * 1.4), 16 * 2 ** 20), budget))

    w_hbm_bytes = 2 * d_model * d_ff * w_item
    cost = pl.CostEstimate(
        flops=4 * rows_p * d_model * d_ff,
        transcendentals=rows_p,
        bytes_accessed=(2 * rows_p * d_model * x_item
                        + w_hbm_bytes * (1 if grid_ff == 1 else grid_rows)),
    )

    out2d = pl.pallas_call(
        ffn_ln_kernel,
        out_shape=jax.ShapeDtypeStruct((rows_p, d_model), x.dtype),
        grid_spec=pltpu.PrefetchScalarGridSpec(
            num_scalar_prefetch=0,
            grid=(grid_rows, grid_ff),
            in_specs=[
                pl.BlockSpec((tile, d_model), lambda i, f: (i, 0)),
                w1_spec,
                w2_spec,
            ],
            out_specs=pl.BlockSpec((tile, d_model), lambda i, f: (i, 0)),
            scratch_shapes=[pltpu.VMEM((tile, d_model), jnp.float32)],
        ),
        compiler_params=pltpu.CompilerParams(
            dimension_semantics=("parallel", "arbitrary"),
            vmem_limit_bytes=vmem_limit,
        ),
        cost_estimate=cost,
    )(x2d, w1_t, w2_t)

    return out2d[:rows].reshape(b, s, d_model)


if __name__ == "__main__":
    # Small shapes consistent with the module's forward: [batch, seq, d_model]
    batch, seq, d_model, d_ff = 2, 8, 128, 256

    key = jax.random.PRNGKey(0)
    kx, k1, k2 = jax.random.split(key, 3)

    x = jax.random.normal(kx, (batch, seq, d_model), dtype=jnp.float32)
    # nn.Linear weight shapes: (out, in)
    w1 = jax.random.normal(k1, (d_ff, d_model), dtype=jnp.float32) * (1.0 / d_model ** 0.5)
    w2 = jax.random.normal(k2, (d_model, d_ff), dtype=jnp.float32) * (1.0 / d_ff ** 0.5)

    # Cast weights to the MXU dtype once, outside the kernel (pre-transposed).
    mxu_dtype = jnp.bfloat16
    w1_t = w1.T.astype(mxu_dtype)   # (d_model, d_ff)
    w2_t = w2.T.astype(mxu_dtype)   # (d_ff, d_model)

    out = poswise_ffn(x, w1_t, w2_t)
    jax.block_until_ready(out)

    # Pure-JAX reference using the same bf16 matmul inputs / f32 accumulation.
    h_ref = jnp.maximum(
        jnp.dot(x.astype(mxu_dtype), w1_t, preferred_element_type=jnp.float32), 0.0)
    y_ref = jnp.dot(h_ref.astype(mxu_dtype), w2_t,
                    preferred_element_type=jnp.float32) + x
    mu = jnp.mean(y_ref, axis=-1, keepdims=True)
    var = jnp.mean((y_ref - mu) ** 2, axis=-1, keepdims=True)
    ref = (y_ref - mu) * lax.rsqrt(var + LN_EPS)

    assert out.shape == (batch, seq, d_model)
    assert jnp.allclose(out, ref, atol=2e-2, rtol=2e-2), "mismatch vs reference"

    print("KERNEL_OK")
</pallas_src>

<mosaic_0001>
module attributes {stable_mosaic.version = 11 : i64} {
  func.func @ffn_ln_kernel(%arg0: i32, %arg1: i32, %arg2: memref<8x128xf32, #tpu.memory_space<vmem>>, %arg3: memref<128x256xbf16, #tpu.memory_space<vmem>>, %arg4: memref<256x128xbf16, #tpu.memory_space<vmem>>, %arg5: memref<8x128xf32, #tpu.memory_space<vmem>>, %arg6: memref<8x128xf32, #tpu.memory_space<vmem>>) attributes {dimension_semantics = [#tpu.dimension_semantics<parallel>, #tpu.dimension_semantics<arbitrary>], iteration_bounds = array<i64: 2, 1>, scalar_prefetch = 0 : i64, scratch_operands = 1 : i64, tpu.core_type = #tpu.core_type<tc>, window_params = [{transform_indices = @transform_0, window_bounds = array<i64: 8, 128>}, {pipeline_mode = #tpu.pipeline_mode<synchronous>, transform_indices = @transform_1, window_bounds = array<i64: 128, 256>}, {pipeline_mode = #tpu.pipeline_mode<synchronous>, transform_indices = @transform_2, window_bounds = array<i64: 256, 128>}, {transform_indices = @transform_3, window_bounds = array<i64: 8, 128>}]} {
    %c0_i32 = arith.constant 0 : i32
    %0 = arith.cmpi eq, %arg1, %c0_i32 : i32
    %1 = arith.extui %0 : i1 to i32
    %c0_i32_0 = arith.constant 0 : i32
    %2 = arith.cmpi ne, %1, %c0_i32_0 : i32
    scf.if %2 {
      %cst_14 = arith.constant 0.000000e+00 : f32
      %18 = vector.broadcast %cst_14 : f32 to vector<8x128xf32>
      %c0_15 = arith.constant 0 : index
      %c0_16 = arith.constant 0 : index
      %19 = vector.load %arg6[%c0_15, %c0_16] : memref<8x128xf32, #tpu.memory_space<vmem>>, vector<8x128xf32>
      tpu.vector_store %arg6[%c0_15, %c0_16], %18 {strides = array<i32>} : memref<8x128xf32, #tpu.memory_space<vmem>>, vector<8x128xf32>,
    } else {
    }
    %c0 = arith.constant 0 : index
    %c0_1 = arith.constant 0 : index
    %3 = vector.load %arg2[%c0, %c0_1] : memref<8x128xf32, #tpu.memory_space<vmem>>, vector<8x128xf32>
    %4 = arith.truncf %3 : vector<8x128xf32> to vector<8x128xbf16>
    %c0_2 = arith.constant 0 : index
    %c0_3 = arith.constant 0 : index
    %5 = vector.load %arg3[%c0_2, %c0_3] : memref<128x256xbf16, #tpu.memory_space<vmem>>, vector<128x256xbf16>
    %cst = arith.constant dense<0.000000e+00> : vector<8x256xf32>
    %6 = tpu.matmul %4, %5, %cst {dimension_numbers = #tpu.dot_dimension_numbers<[1], [0], [0], [1], [0, 0, 1, 1], [], []>} : vector<8x128xbf16>, vector<128x256xbf16>, vector<8x256xf32> -> vector<8x256xf32>
    %cst_4 = arith.constant 0.000000e+00 : f32
    %7 = vector.broadcast %cst_4 : f32 to vector<8x256xf32>
    %8 = arith.maximumf %6, %7 : vector<8x256xf32>
    %9 = arith.truncf %8 : vector<8x256xf32> to vector<8x256xbf16>
    %c0_5 = arith.constant 0 : index
    %c0_6 = arith.constant 0 : index
    %10 = vector.load %arg6[%c0_5, %c0_6] : memref<8x128xf32, #tpu.memory_space<vmem>>, vector<8x128xf32>
    %c0_7 = arith.constant 0 : index
    %c0_8 = arith.constant 0 : index
    %11 = vector.load %arg4[%c0_7, %c0_8] : memref<256x128xbf16, #tpu.memory_space<vmem>>, vector<256x128xbf16>
    %cst_9 = arith.constant dense<0.000000e+00> : vector<8x128xf32>
    %12 = tpu.matmul %9, %11, %cst_9 {dimension_numbers = #tpu.dot_dimension_numbers<[1], [0], [0], [1], [0, 0, 1, 1], [], []>} : vector<8x256xbf16>, vector<256x128xbf16>, vector<8x128xf32> -> vector<8x128xf32>
    %13 = arith.addf %10, %12 : vector<8x128xf32>
    %c0_10 = arith.constant 0 : index
    %c0_11 = arith.constant 0 : index
    %14 = vector.load %arg6[%c0_10, %c0_11] : memref<8x128xf32, #tpu.memory_space<vmem>>, vector<8x128xf32>
    tpu.vector_store %arg6[%c0_10, %c0_11], %13 {strides = array<i32>} : memref<8x128xf32, #tpu.memory_space<vmem>>, vector<8x128xf32>,
    %c0_i32_12 = arith.constant 0 : i32
    %15 = arith.cmpi eq, %arg1, %c0_i32_12 : i32
    %16 = arith.extui %15 : i1 to i32
    %c0_i32_13 = arith.constant 0 : i32
    %17 = arith.cmpi ne, %16, %c0_i32_13 : i32
    scf.if %17 {
      %c0_14 = arith.constant 0 : index
      %c0_15 = arith.constant 0 : index
      %18 = vector.load %arg6[%c0_14, %c0_15] : memref<8x128xf32, #tpu.memory_space<vmem>>, vector<8x128xf32>
      %c0_16 = arith.constant 0 : index
      %c0_17 = arith.constant 0 : index
      %19 = vector.load %arg2[%c0_16, %c0_17] : memref<8x128xf32, #tpu.memory_space<vmem>>, vector<8x128xf32>
      %20 = arith.addf %18, %19 : vector<8x128xf32>
      %cst_18 = arith.constant dense<0.000000e+00> : vector<8xf32>
      %21 = vector.multi_reduction <add>, %20, %cst_18 [1] : vector<8x128xf32> to vector<8xf32>
      %22 = vector.shape_cast %21 : vector<8xf32> to vector<8x1xf32>
      %cst_19 = arith.constant 1.280000e+02 : f32
      %23 = vector.broadcast %cst_19 : f32 to vector<8x1xf32>
      %24 = arith.divf %22, %23 : vector<8x1xf32>
      %25 = arith.mulf %20, %20 : vector<8x128xf32>
      %cst_20 = arith.constant dense<0.000000e+00> : vector<8xf32>
      %26 = vector.multi_reduction <add>, %25, %cst_20 [1] : vector<8x128xf32> to vector<8xf32>
      %27 = vector.shape_cast %26 : vector<8xf32> to vector<8x1xf32>
      %cst_21 = arith.constant 1.280000e+02 : f32
      %28 = vector.broadcast %cst_21 : f32 to vector<8x1xf32>
      %29 = arith.divf %27, %28 : vector<8x1xf32>
      %30 = arith.mulf %24, %24 : vector<8x1xf32>
      %31 = arith.subf %29, %30 : vector<8x1xf32>
      %cst_22 = arith.constant 0.000000e+00 : f32
      %32 = vector.broadcast %cst_22 : f32 to vector<8x1xf32>
      %33 = arith.maximumf %31, %32 : vector<8x1xf32>
      %34 = vector.broadcast %24 : vector<8x1xf32> to vector<8x128xf32>
      %35 = arith.subf %20, %34 : vector<8x128xf32>
      %cst_23 = arith.constant 9.99999974E-6 : f32
      %36 = vector.broadcast %cst_23 : f32 to vector<8x1xf32>
      %37 = arith.addf %33, %36 : vector<8x1xf32>
      %38 = math.rsqrt %37 : vector<8x1xf32>
      %39 = vector.broadcast %38 : vector<8x1xf32> to vector<8x128xf32>
      %40 = arith.mulf %35, %39 : vector<8x128xf32>
      %c0_24 = arith.constant 0 : index
      %c0_25 = arith.constant 0 : index
      %41 = vector.load %arg5[%c0_24, %c0_25] : memref<8x128xf32, #tpu.memory_space<vmem>>, vector<8x128xf32>
      tpu.vector_store %arg5[%c0_24, %c0_25], %40 {strides = array<i32>} : memref<8x128xf32, #tpu.memory_space<vmem>>, vector<8x128xf32>,
    } else {
    }
    return
  }
  func.func @transform_0(%arg0: i32, %arg1: i32) -> (i32, i32) {
    %c0_i32 = arith.constant 0 : i32
    %c0_i32_0 = arith.constant 0 : i32
    return %arg0, %c0_i32 : i32, i32
  }
  func.func @transform_1(%arg0: i32, %arg1: i32) -> (i32, i32) {
    %c0_i32 = arith.constant 0 : i32
    %c0_i32_0 = arith.constant 0 : i32
    %c0_i32_1 = arith.constant 0 : i32
    return %c0_i32, %c0_i32_0 : i32, i32
  }
  func.func @transform_2(%arg0: i32, %arg1: i32) -> (i32, i32) {
    %c0_i32 = arith.constant 0 : i32
    %c0_i32_0 = arith.constant 0 : i32
    %c0_i32_1 = arith.constant 0 : i32
    return %c0_i32, %c0_i32_0 : i32, i32
  }
  func.func @transform_3(%arg0: i32, %arg1: i32) -> (i32, i32) {
    %c0_i32 = arith.constant 0 : i32
    %c0_i32_0 = arith.constant 0 : i32
    return %arg0, %c0_i32 : i32, i32
  }
}

</mosaic_0001>

<llo_original>
// kernel: poswise_ffn.1
$region0: #{poswise_ffn.1}
  #allocation0 [shape = 'u32[]', space=smem, size = 0x4, offset = 0x4, fixed_abs, tag = 'smem constant byte address 0x4 - core index']
  #allocation1 [shape = 'u32[144,128]{1,0:T(1,128)}', space=vmem, size = 0x12000, scoped, tag = 'internal scratch']
  #allocation2 [shape = 'f32[8,128]{1,0:T(8,128)}', space=vmem, size = 0x1000, scoped, tag = 'scratch operand']
  %s0 = inlined_call_operand.hbm [shape: f32[16,128], index: 0, kind: input, shape index: {}]
  %s1 = inlined_call_operand.hbm [shape: bf16[128,256], index: 1, kind: input, shape index: {}]
  %s2 = inlined_call_operand.hbm [shape: bf16[256,128], index: 2, kind: input, shape index: {}]
  %s3 = inlined_call_operand.hbm [shape: f32[16,128], index: 3, kind: output, shape index: {}]
  %s4 = sld [smem:[#allocation0]]
  $region65: #{poswise_ffn.1} parent=0
    _
  %s6 = ssub.s32 1, %s4
  %s7 = scalar_select 0, %s6, %s4
  $region1: #{poswise_ffn.1} parent=0
    #allocation3 [shape = 'u8[8192]{0}', space=vmem, size = 0x2000, scoped, tag = 'input window, operand 0']
    #allocation4 [shape = 's32[2]{0}', space=sflag, size = 0x8, scoped, tag = 'scoped memory for poswise_ffn.1']
    #allocation5 [shape = 's32[2]{0}', space=sflag, size = 0x8, scoped, tag = 'scoped memory for poswise_ffn.1']
    #allocation6 [shape = 'u8[65536]{0}', space=vmem, size = 0x10000, scoped, tag = 'input window, operand 1, single buffered']
    #allocation7 [shape = 's32[1]{0}', space=sflag, size = 0x4, scoped, tag = 'scoped memory for poswise_ffn.1']
    #allocation8 [shape = 'u8[65536]{0}', space=vmem, size = 0x10000, scoped, tag = 'input window, operand 2, single buffered']
    #allocation9 [shape = 'u8[8192]{0}', space=vmem, size = 0x2000, scoped, tag = 'output window, operand 0']
    %8 = vsyncpa [#allocation4], 0
    %s9 = scalar_lea.sflag [#allocation4], 1
    %10 = vsyncpa %s9, 0
    %11 = vsyncpa [#allocation7], 0
    %12 = vsyncpa [#allocation5], 0
    %s13 = scalar_lea.sflag [#allocation5], 1
    %14 = vsyncpa %s13, 0
    loop: start=0, step=1, limit=4
    $region2: #{poswise_ffn.1} parent=1 // loop_pre_header
      _
    $region3: #{poswise_ffn.1} parent=1 // loop_header
      %s16 = sphi 0, %s20
      %p17 = scmp.ge.s32.totalorder %s16, 4
      %s23 = sphi 0, %s35
      %s24 = sphi 0, %s31
      %s25 = sphi 0, %s23
      %s26 = sphi 0, %s24
      %s27 = sphi 0, %s25
      %s28 = sphi 0, %s26
      %s38 = sphi 0, %s40
      %s41 = sphi 0, %s38
      %s42 = sphi 0, %s41
      %s58 = sphi 0, %s42
      %s62 = sphi 0, %s62
      %s64 = sphi 0, %s62
      %s65 = sphi 0, %s64
      %s79 = sphi 0, %s65
      %s83 = sphi 0, %s83
      %s85 = sphi 0, %s83
      %s86 = sphi 0, %s85
      %s100 = sphi 0, %s86
      %s106 = sphi 0, %s108
      %s109 = sphi 0, %s106
      %s110 = sphi 0, %s109
      %s126 = sphi 0, %s110
    $region4: #{poswise_ffn.1} parent=1 // loop_header_branch
      %19 = sbr.rel (%p17) target = $region8
    $region5: #{poswise_ffn.1} parent=1 // loop_body
      %s21 = ssub.s32 %s16, 1
      %s22 = ssub.s32 %s16, 2
      %s29 = sadd.s32 1, %s24
      %p30 = scmp.ge.s32.totalorder %s29, 1
      %s31 = scalar_select %p30, 0, %s29
      %s32 = sadd.s32 1, %s23
      %s33 = scalar_select %p30, %s32, %s23
      %p34 = scmp.ge.s32.totalorder %s33, 2
      %s35 = scalar_select %p34, 0, %s33
      %s36 = ssub.s32 %s23, %s35
      %p37 = scmp.eq.s32.totalorder %s36, 0
      %s39 = sadd.s32 %s38, 1
      %s40 = scalar_select %p37, %s38, %s39
      %p43 = pneg %p37
      %p44 = scmp.eq.s32.totalorder %s16, 1
      %p45 = por %p43, %p44
      %p46 = scmp.ne.s32.totalorder %s38, %s41
      %p47 = scmp.eq.s32.totalorder %s16, 0
      %p48 = por %p46, %p47
      %p49 = scmp.ne.s32.totalorder %s38, %s41
      %p50 = scmp.eq.s32.totalorder %s21, 1
      %p51 = por %p49, %p50
      %p52 = scmp.ne.s32.totalorder %s41, %s42
      %p53 = scmp.eq.s32.totalorder %s21, 0
      %p54 = por %p52, %p53
      %p55 = scmp.ne.s32.totalorder %s41, %s42
      %p56 = scmp.eq.s32.totalorder %s22, 1
      %p57 = por %p55, %p56
      %p59 = scmp.ne.s32.totalorder %s42, %s58
      %p60 = scmp.eq.s32.totalorder %s22, 0
      %p61 = por %p59, %p60
      %s63 = sadd.s32 %s62, 1
      %p66 = scmp.eq.s32.totalorder %s16, 1
      %p67 = scmp.ne.s32.totalorder %s62, %s64
      %p68 = scmp.eq.s32.totalorder %s16, 0
      %p69 = por %p67, %p68
      %p70 = scmp.ne.s32.totalorder %s62, %s64
      %p71 = scmp.eq.s32.totalorder %s21, 1
      %p72 = por %p70, %p71
      %p73 = scmp.ne.s32.totalorder %s64, %s65
      %p74 = scmp.eq.s32.totalorder %s21, 0
      %p75 = por %p73, %p74
      %p76 = scmp.ne.s32.totalorder %s64, %s65
      %p77 = scmp.eq.s32.totalorder %s22, 1
      %p78 = por %p76, %p77
      %p80 = scmp.ne.s32.totalorder %s65, %s79
      %p81 = scmp.eq.s32.totalorder %s22, 0
      %p82 = por %p80, %p81
      %s84 = sadd.s32 %s83, 1
      %p87 = scmp.eq.s32.totalorder %s16, 1
      %p88 = scmp.ne.s32.totalorder %s83, %s85
      %p89 = scmp.eq.s32.totalorder %s16, 0
      %p90 = por %p88, %p89
      %p91 = scmp.ne.s32.totalorder %s83, %s85
      %p92 = scmp.eq.s32.totalorder %s21, 1
      %p93 = por %p91, %p92
      %p94 = scmp.ne.s32.totalorder %s85, %s86
      %p95 = scmp.eq.s32.totalorder %s21, 0
      %p96 = por %p94, %p95
      %p97 = scmp.ne.s32.totalorder %s85, %s86
      %p98 = scmp.eq.s32.totalorder %s22, 1
      %p99 = por %p97, %p98
      %p101 = scmp.ne.s32.totalorder %s86, %s100
      %p102 = scmp.eq.s32.totalorder %s22, 0
      %p103 = por %p101, %p102
      %s104 = ssub.s32 %s23, %s35
      %p105 = scmp.eq.s32.totalorder %s104, 0
      %s107 = sadd.s32 %s106, 1
      %s108 = scalar_select %p105, %s106, %s107
      %p111 = pneg %p105
      %p112 = scmp.eq.s32.totalorder %s16, 1
      %p113 = por %p111, %p112
      %p114 = scmp.ne.s32.totalorder %s106, %s109
      %p115 = scmp.eq.s32.totalorder %s16, 0
      %p116 = por %p114, %p115
      %p117 = scmp.ne.s32.totalorder %s106, %s109
      %p118 = scmp.eq.s32.totalorder %s21, 1
      %p119 = por %p117, %p118
      %p120 = scmp.ne.s32.totalorder %s109, %s110
      %p121 = scmp.eq.s32.totalorder %s21, 0
      %p122 = por %p120, %p121
      %p123 = scmp.ne.s32.totalorder %s109, %s110
      %p124 = scmp.eq.s32.totalorder %s22, 1
      %p125 = por %p123, %p124
      %p127 = scmp.ne.s32.totalorder %s110, %s126
      %p128 = scmp.eq.s32.totalorder %s22, 0
      %p129 = por %p127, %p128
      %p130 = scmp.le.s32.totalorder 1, %s16
      %p131 = scmp.lt.s32.totalorder %s16, 3
      %p132 = pnand %p130, %p131
      %p133 = pneg %p132
      // Predicated region
      $region9: #{poswise_ffn.1} parent=5 // pred_check
        _
      $region10: #{poswise_ffn.1} parent=5 // pred_check_branch
        %135 = sbr.rel (%p132) target = $region12
      $region11: #{poswise_ffn.1} parent=5 // pred_region
        %s136 = ssub.s32 %s16, 1
        // Predicated region
        $region13: #{poswise_ffn.1} parent=11 // pred_check
          %p137 = pneg %p75
        $region14: #{poswise_ffn.1} parent=11 // pred_check_branch
          %139 = sbr.rel (%p137) target = $region16
        $region15: #{poswise_ffn.1} parent=11 // pred_region
          %s141 = ssub.s32 2048, 2048
          %142 = vsyncadd [#allocation7], %s141
          %s143 = sshll.u32 [#allocation6], 4
          %s144 = int_to_ptr.vmem [resolvable:$true] %s143
          %149 = dma.hbm_to_vmem [thread:$0]  %s1, 2048, %s144, [#allocation7], 128, 128, 8
        $region16: #{poswise_ffn.1} parent=11 // pred_fallthru
          _
        // Predicated region
        $region17: #{poswise_ffn.1} parent=11 // pred_check
          %p150 = pneg %p96
        $region18: #{poswise_ffn.1} parent=11 // pred_check_branch
          %152 = sbr.rel (%p150) target = $region20
        $region19: #{poswise_ffn.1} parent=11 // pred_region
          %s154 = ssub.s32 2048, 2048
          %155 = vsyncadd [#allocation7], %s154
          %s156 = sshll.u32 [#allocation8], 4
          %s157 = int_to_ptr.vmem [resolvable:$true] %s156
          %162 = dma.hbm_to_vmem [thread:$0]  %s2, 2048, %s157, [#allocation7], 64, 64, 4
        $region20: #{poswise_ffn.1} parent=11 // pred_fallthru
          _
      $region12: #{poswise_ffn.1} parent=5 // pred_fallthru
        _
      %p163 = scmp.lt.s32.totalorder %s16, 2
      // Predicated region
      $region21: #{poswise_ffn.1} parent=5 // pred_check
        %p164 = pneg %p163
      $region22: #{poswise_ffn.1} parent=5 // pred_check_branch
        %166 = sbr.rel (%p164) target = $region24
      $region23: #{poswise_ffn.1} parent=5 // pred_region
        // Predicated region
        $region25: #{poswise_ffn.1} parent=23 // pred_check
          %p167 = pneg %p48
        $region26: #{poswise_ffn.1} parent=23 // pred_check_branch
          %169 = sbr.rel (%p167) target = $region28
        $region27: #{poswise_ffn.1} parent=23 // pred_region
          %s170 = sand.u32 %s38, 1
          %s171 = scalar_lea.sflag [#allocation4], %s170
          %s172 = sand.u32 %s38, 1
          %s173 = smul.addr %s172, 8
          %s174 = scalar_lea.vmem [#allocation3], %s173
          %s176 = ssub.s32 128, 128
          %177 = vsyncadd %s171, %s176
          %s178 = smul.addr %s23, 128
          %s179 = scalar_lea.hbm %s0, %s178
          %s181 = sshll.u32 %s174, 4
          %s182 = int_to_ptr.vmem [resolvable:$true] %s181
          %184 = dma.hbm_to_vmem [thread:$0]  %s179, 128, %s182, %s171
        $region28: #{poswise_ffn.1} parent=23 // pred_fallthru
          _
      $region24: #{poswise_ffn.1} parent=5 // pred_fallthru
        _
      %p185 = scmp.le.s32.totalorder 1, %s16
      %p186 = scmp.lt.s32.totalorder %s16, 3
      %p187 = pnand %p185, %p186
      %p188 = pneg %p187
      // Predicated region
      $region29: #{poswise_ffn.1} parent=5 // pred_check
        _
      $region30: #{poswise_ffn.1} parent=5 // pred_check_branch
        %190 = sbr.rel (%p187) target = $region32
      $region31: #{poswise_ffn.1} parent=5 // pred_region
        %s191 = ssub.s32 %s16, 1
        %s192 = sand.u32 %s41, 1
        %s193 = scalar_lea.sflag [#allocation4], %s192
        %s194 = sand.u32 %s41, 1
        %s195 = smul.addr %s194, 8
        %s196 = scalar_lea.vmem [#allocation3], %s195
        // Predicated region
        $region33: #{poswise_ffn.1} parent=31 // pred_check
          %p197 = pneg %p54
        $region34: #{poswise_ffn.1} parent=31 // pred_check_branch
          %199 = sbr.rel (%p197) target = $region36
        $region35: #{poswise_ffn.1} parent=31 // pred_region
          %200 = dma.done %s193, 128
        $region36: #{poswise_ffn.1} parent=31 // pred_fallthru
          _
        // Predicated region
        $region37: #{poswise_ffn.1} parent=31 // pred_check
          %p201 = pneg %p75
        $region38: #{poswise_ffn.1} parent=31 // pred_check_branch
          %203 = sbr.rel (%p201) target = $region40
        $region39: #{poswise_ffn.1} parent=31 // pred_region
          %204 = dma.done [#allocation7], 2048
        $region40: #{poswise_ffn.1} parent=31 // pred_fallthru
          _
        // Predicated region
        $region41: #{poswise_ffn.1} parent=31 // pred_check
          %p205 = pneg %p96
        $region42: #{poswise_ffn.1} parent=31 // pred_check_branch
          %207 = sbr.rel (%p205) target = $region44
        $region43: #{poswise_ffn.1} parent=31 // pred_region
          %208 = dma.done [#allocation7], 2048
        $region44: #{poswise_ffn.1} parent=31 // pred_fallthru
          _
        %s209 = sand.u32 %s41, 1
        %s210 = scalar_lea.sflag [#allocation4], %s209
        %s211 = sand.u32 %s41, 1
        %s212 = smul.addr %s211, 8
        %s213 = scalar_lea.vmem [#allocation3], %s212
        %p214 = pneg %p54
        %p215 = pneg %p51
        %p216 = pneg %p75
        %p217 = pneg %p72
        %p218 = pneg %p96
        %p219 = pneg %p93
        %p220 = pneg %p122
        %p221 = pneg %p119
        %s222 = sand.u32 %s109, 1
        %s223 = scalar_lea.sflag [#allocation5], %s222
        %s224 = sand.u32 %s109, 1
        %s225 = smul.addr %s224, 8
        %s226 = scalar_lea.vmem [#allocation9], %s225
        %p228 = scmp.eq.s32.totalorder %s26, 0
        // Predicated region
        $region45: #{poswise_ffn.1} parent=31 // pred_check
          %p229 = pneg %p228
        $region46: #{poswise_ffn.1} parent=31 // pred_check_branch
          %231 = sbr.rel (%p229) target = $region48
        $region47: #{poswise_ffn.1} parent=31 // pred_region
          %232 = vst [vmem:[#allocation2] sm:$0xff] 0.0
        $region48: #{poswise_ffn.1} parent=31 // pred_fallthru
          _
        %v233 = vld [vmem:[%s196] sm:$0xff]
        %v234 = vpack.c.bf16 %v233, %v233
        %v235 = vld [vmem:[#allocation6] sm:$0xff]
        %v236 = vld [vmem:[#allocation6 + $0x8] sm:$0xff]
        %v237 = vld [vmem:[#allocation6 + $0x10] sm:$0xff]
        %v238 = vld [vmem:[#allocation6 + $0x18] sm:$0xff]
        %v239 = vld [vmem:[#allocation6 + $0x20] sm:$0xff]
        %v240 = vld [vmem:[#allocation6 + $0x28] sm:$0xff]
        %v241 = vld [vmem:[#allocation6 + $0x30] sm:$0xff]
        %v242 = vld [vmem:[#allocation6 + $0x38] sm:$0xff]
        %v243 = vld [vmem:[#allocation6 + $0x40] sm:$0xff]
        %v244 = vld [vmem:[#allocation6 + $0x48] sm:$0xff]
        %v245 = vld [vmem:[#allocation6 + $0x50] sm:$0xff]
        %v246 = vld [vmem:[#allocation6 + $0x58] sm:$0xff]
        %v247 = vld [vmem:[#allocation6 + $0x60] sm:$0xff]
        %v248 = vld [vmem:[#allocation6 + $0x68] sm:$0xff]
        %v249 = vld [vmem:[#allocation6 + $0x70] sm:$0xff]
        %v250 = vld [vmem:[#allocation6 + $0x78] sm:$0xff]
        %v267 = vunpack.c.l.b16 %v235
        %v268 = vunpack.c.h.b16 %v235
        %v269 = vunpack.c.l.b16 %v236
        %v270 = vunpack.c.h.b16 %v236
        %v271 = vunpack.c.l.b16 %v237
        %v272 = vunpack.c.h.b16 %v237
        %v273 = vunpack.c.l.b16 %v238
        %v274 = vunpack.c.h.b16 %v238
        %v275 = vunpack.c.l.b16 %v239
        %v276 = vunpack.c.h.b16 %v239
        %v277 = vunpack.c.l.b16 %v240
        %v278 = vunpack.c.h.b16 %v240
        %v279 = vunpack.c.l.b16 %v241
        %v280 = vunpack.c.h.b16 %v241
        %v281 = vunpack.c.l.b16 %v242
        %v282 = vunpack.c.h.b16 %v242
        %v283 = vunpack.c.l.b16 %v243
        %v284 = vunpack.c.h.b16 %v243
        %v285 = vunpack.c.l.b16 %v244
        %v286 = vunpack.c.h.b16 %v244
        %v287 = vunpack.c.l.b16 %v245
        %v288 = vunpack.c.h.b16 %v245
        %v289 = vunpack.c.l.b16 %v246
        %v290 = vunpack.c.h.b16 %v246
        %v291 = vunpack.c.l.b16 %v247
        %v292 = vunpack.c.h.b16 %v247
        %v293 = vunpack.c.l.b16 %v248
        %v294 = vunpack.c.h.b16 %v248
        %v295 = vunpack.c.l.b16 %v249
        %v296 = vunpack.c.h.b16 %v249
        %v297 = vunpack.c.l.b16 %v250
        %v298 = vunpack.c.h.b16 %v250
        %v299 = vpack.c.b16 %v269, %v267
        %v300 = vpack.c.b16 %v270, %v268
        %v301 = vpack.c.b16 %v273, %v271
        %v302 = vpack.c.b16 %v274, %v272
        %v303 = vpack.c.b16 %v277, %v275
        %v304 = vpack.c.b16 %v278, %v276
        %v305 = vpack.c.b16 %v281, %v279
        %v306 = vpack.c.b16 %v282, %v280
        %v307 = vpack.c.b16 %v285, %v283
        %v308 = vpack.c.b16 %v286, %v284
        %v309 = vpack.c.b16 %v289, %v287
        %v310 = vpack.c.b16 %v290, %v288
        %v311 = vpack.c.b16 %v293, %v291
        %v312 = vpack.c.b16 %v294, %v292
        %v313 = vpack.c.b16 %v297, %v295
        %v314 = vpack.c.b16 %v298, %v296
        %331 = vmatprep.subr.bf16.mxu0 %v314
        %332 = vmatpush1.bf16.msra.mxu0 %v313
        %333 = vmatprep.subr.bf16.mxu0 %v312
        %334 = vmatpush1.bf16.msra.mxu0 %v311
        %335 = vmatprep.subr.bf16.mxu0 %v310
        %336 = vmatpush1.bf16.msra.mxu0 %v309
        %337 = vmatprep.subr.bf16.mxu0 %v308
        %338 = vmatpush1.bf16.msra.mxu0 %v307
        %339 = vmatprep.subr.bf16.mxu0 %v306
        %340 = vmatpush1.bf16.msra.mxu0 %v305
        %341 = vmatprep.subr.bf16.mxu0 %v304
        %342 = vmatpush1.bf16.msra.mxu0 %v303
        %343 = vmatprep.subr.bf16.mxu0 %v302
        %344 = vmatpush1.bf16.msra.mxu0 %v301
        %345 = vmatprep.subr.bf16.mxu0 %v300
        %346 = vmatpush1.bf16.msra.mxu0 %v299
        %347 = vmatprep.subr.bf16.mxu0 0
        %348 = vmatpush2.bf16.msra.mxu0 0
        %349 = vmatprep.subr.bf16.mxu0 0
        %350 = vmatpush2.bf16.msra.mxu0 0
        %351 = vmatprep.subr.bf16.mxu0 0
        %352 = vmatpush2.bf16.msra.mxu0 0
        %353 = vmatprep.subr.bf16.mxu0 0
        %354 = vmatpush2.bf16.msra.mxu0 0
        %355 = vmatprep.subr.bf16.mxu0 0
        %356 = vmatpush2.bf16.msra.mxu0 0
        %357 = vmatprep.subr.bf16.mxu0 0
        %358 = vmatpush2.bf16.msra.mxu0 0
        %359 = vmatprep.subr.bf16.mxu0 0
        %360 = vmatpush2.bf16.msra.mxu0 0
        %361 = vmatprep.subr.bf16.mxu0 0
        %362 = vmatpush2.bf16.msra.mxu0 0
        %363 = vmatprep.mubr.bf16.mxu0 0
        %364 = vmatmul.mubr.bf16.gmra.mxu0 %v234
        %v365 = vpop.f32.mrf.mxu0
        %v366 = vadd.f32 0.0, %v365
        %v367 = vpop.f32.mrf.mxu0
        %v368 = vadd.f32 0.0, %v367
        %v369 = vpop.f32.mrf.mxu0
        %v370 = vpop.f32.mrf.mxu0
        %371 = vdwg.mxu0
        %v372 = vmax.f32 %v366, 0.0
        %v373 = vmax.f32 %v368, 0.0
        %v374 = vpack.c.bf16 %v372, %v372
        %v375 = vpack.c.bf16 %v373, %v373
        %v376 = vld [vmem:[#allocation2] sm:$0xff]
        %v377 = vld [vmem:[#allocation8] sm:$0xf]
        %v378 = vld [vmem:[#allocation8 + $0x4] sm:$0xf]
        %v379 = vld [vmem:[#allocation8 + $0x8] sm:$0xf]
        %v380 = vld [vmem:[#allocation8 + $0xc] sm:$0xf]
        %v381 = vld [vmem:[#allocation8 + $0x10] sm:$0xf]
        %v382 = vld [vmem:[#allocation8 + $0x14] sm:$0xf]
        %v383 = vld [vmem:[#allocation8 + $0x18] sm:$0xf]
        %v384 = vld [vmem:[#allocation8 + $0x1c] sm:$0xf]
        %v385 = vld [vmem:[#allocation8 + $0x20] sm:$0xf]
        %v386 = vld [vmem:[#allocation8 + $0x24] sm:$0xf]
        %v387 = vld [vmem:[#allocation8 + $0x28] sm:$0xf]
        %v388 = vld [vmem:[#allocation8 + $0x2c] sm:$0xf]
        %v389 = vld [vmem:[#allocation8 + $0x30] sm:$0xf]
        %v390 = vld [vmem:[#allocation8 + $0x34] sm:$0xf]
        %v391 = vld [vmem:[#allocation8 + $0x38] sm:$0xf]
        %v392 = vld [vmem:[#allocation8 + $0x3c] sm:$0xf]
        %v393 = vld [vmem:[#allocation8 + $0x40] sm:$0xf]
        %v394 = vld [vmem:[#allocation8 + $0x44] sm:$0xf]
        %v395 = vld [vmem:[#allocation8 + $0x48] sm:$0xf]
        %v396 = vld [vmem:[#allocation8 + $0x4c] sm:$0xf]
        %v397 = vld [vmem:[#allocation8 + $0x50] sm:$0xf]
        %v398 = vld [vmem:[#allocation8 + $0x54] sm:$0xf]
        %v399 = vld [vmem:[#allocation8 + $0x58] sm:$0xf]
        %v400 = vld [vmem:[#allocation8 + $0x5c] sm:$0xf]
        %v401 = vld [vmem:[#allocation8 + $0x60] sm:$0xf]
        %v402 = vld [vmem:[#allocation8 + $0x64] sm:$0xf]
        %v403 = vld [vmem:[#allocation8 + $0x68] sm:$0xf]
        %v404 = vld [vmem:[#allocation8 + $0x6c] sm:$0xf]
        %v405 = vld [vmem:[#allocation8 + $0x70] sm:$0xf]
        %v406 = vld [vmem:[#allocation8 + $0x74] sm:$0xf]
        %v407 = vld [vmem:[#allocation8 + $0x78] sm:$0xf]
        %v408 = vld [vmem:[#allocation8 + $0x7c] sm:$0xf]
        %v441 = vunpack.c.l.b16 %v377
        %v442 = vunpack.c.l.b16 %v378
        %v443 = vunpack.c.l.b16 %v379
        %v444 = vunpack.c.l.b16 %v380
        %v445 = vunpack.c.l.b16 %v381
        %v446 = vunpack.c.l.b16 %v382
        %v447 = vunpack.c.l.b16 %v383
        %v448 = vunpack.c.l.b16 %v384
        %v449 = vunpack.c.l.b16 %v385
        %v450 = vunpack.c.l.b16 %v386
        %v451 = vunpack.c.l.b16 %v387
        %v452 = vunpack.c.l.b16 %v388
        %v453 = vunpack.c.l.b16 %v389
        %v454 = vunpack.c.l.b16 %v390
        %v455 = vunpack.c.l.b16 %v391
        %v456 = vunpack.c.l.b16 %v392
        %v457 = vunpack.c.l.b16 %v393
        %v458 = vunpack.c.l.b16 %v394
        %v459 = vunpack.c.l.b16 %v395
        %v460 = vunpack.c.l.b16 %v396
        %v461 = vunpack.c.l.b16 %v397
        %v462 = vunpack.c.l.b16 %v398
        %v463 = vunpack.c.l.b16 %v399
        %v464 = vunpack.c.l.b16 %v400
        %v465 = vunpack.c.l.b16 %v401
        %v466 = vunpack.c.l.b16 %v402
        %v467 = vunpack.c.l.b16 %v403
        %v468 = vunpack.c.l.b16 %v404
        %v469 = vunpack.c.l.b16 %v405
        %v470 = vunpack.c.l.b16 %v406
        %v471 = vunpack.c.l.b16 %v407
        %v472 = vunpack.c.l.b16 %v408
        %v473 = vpack.c.b16 %v442, %v441
        %v474 = vpack.c.b16 %v444, %v443
        %v475 = vpack.c.b16 %v446, %v445
        %v476 = vpack.c.b16 %v448, %v447
        %v477 = vpack.c.b16 %v450, %v449
        %v478 = vpack.c.b16 %v452, %v451
        %v479 = vpack.c.b16 %v454, %v453
        %v480 = vpack.c.b16 %v456, %v455
        %v481 = vpack.c.b16 %v458, %v457
        %v482 = vpack.c.b16 %v460, %v459
        %v483 = vpack.c.b16 %v462, %v461
        %v484 = vpack.c.b16 %v464, %v463
        %v485 = vpack.c.b16 %v466, %v465
        %v486 = vpack.c.b16 %v468, %v467
        %v487 = vpack.c.b16 %v470, %v469
        %v488 = vpack.c.b16 %v472, %v471
        %505 = vmatprep.subr.bf16.mxu0 0
        %506 = vmatpush1.bf16.msra.mxu0 %v480
        %507 = vmatprep.subr.bf16.mxu0 0
        %508 = vmatpush1.bf16.msra.mxu0 %v479
        %509 = vmatprep.subr.bf16.mxu0 0
        %510 = vmatpush1.bf16.msra.mxu0 %v478
        %511 = vmatprep.subr.bf16.mxu0 0
        %512 = vmatpush1.bf16.msra.mxu0 %v477
        %513 = vmatprep.subr.bf16.mxu0 0
        %514 = vmatpush1.bf16.msra.mxu0 %v476
        %515 = vmatprep.subr.bf16.mxu0 0
        %516 = vmatpush1.bf16.msra.mxu0 %v475
        %517 = vmatprep.subr.bf16.mxu0 0
        %518 = vmatpush1.bf16.msra.mxu0 %v474
        %519 = vmatprep.subr.bf16.mxu0 0
        %520 = vmatpush1.bf16.msra.mxu0 %v473
        %521 = vmatprep.subr.bf16.mxu0 0
        %522 = vmatpush2.bf16.msra.mxu0 %v488
        %523 = vmatprep.subr.bf16.mxu0 0
        %524 = vmatpush2.bf16.msra.mxu0 %v487
        %525 = vmatprep.subr.bf16.mxu0 0
        %526 = vmatpush2.bf16.msra.mxu0 %v486
        %527 = vmatprep.subr.bf16.mxu0 0
        %528 = vmatpush2.bf16.msra.mxu0 %v485
        %529 = vmatprep.subr.bf16.mxu0 0
        %530 = vmatpush2.bf16.msra.mxu0 %v484
        %531 = vmatprep.subr.bf16.mxu0 0
        %532 = vmatpush2.bf16.msra.mxu0 %v483
        %533 = vmatprep.subr.bf16.mxu0 0
        %534 = vmatpush2.bf16.msra.mxu0 %v482
        %535 = vmatprep.subr.bf16.mxu0 0
        %536 = vmatpush2.bf16.msra.mxu0 %v481
        %537 = vmatprep.mubr.bf16.mxu0 %v375
        %538 = vmatmul.mubr.bf16.gmra.mxu0 %v374
        %v539 = vpop.f32.mrf.mxu0
        %v540 = vadd.f32 0.0, %v539
        %v541 = vpop.f32.mrf.mxu0
        %v542 = vpop.f32.mrf.mxu0
        %v543 = vpop.f32.mrf.mxu0
        %544 = vdwg.mxu0
        %v545 = vadd.f32 %v376, %v540
        %546 = vst [vmem:[#allocation2] sm:$0xff] %v545
        // Predicated region
        $region49: #{poswise_ffn.1} parent=31 // pred_check
          %p547 = pneg %p228
        $region50: #{poswise_ffn.1} parent=31 // pred_check_branch
          %549 = sbr.rel (%p547) target = $region52
        $region51: #{poswise_ffn.1} parent=31 // pred_region
          %v550 = vld [vmem:[#allocation2] sm:$0xff]
          %v551 = vld [vmem:[%s196] sm:$0xff]
          %v552 = vadd.f32 %v550, %v551
          %553 = vadd.xlane.f32.xlu0 %v552
          %v554 = vpop.xlane.xlu0 %553
          %v555 = vrcp.pop 128.0
          %v556 = vmul.f32 %v554, %v555
          %v557 = vmul.f32 %v552, %v552
          %558 = vadd.xlane.f32.xlu0 %v557
          %v559 = vpop.xlane.xlu0 %558
          %v560 = vmul.f32 %v559, %v555
          %v561 = vmul.f32 %v556, %v556
          %v562 = vsub.f32 %v560, %v561
          %v563 = vmax.f32 %v562, 0.0
          %v564 = vsub.f32 %v552, %v556
          %v565 = vadd.f32 %v563, 1e-05
          %v566 = vrsqrt.pop %v565
          %v567 = vmul.f32 %v564, %v566
          %568 = vst [vmem:[%s226] sm:$0xff] %v567
        $region52: #{poswise_ffn.1} parent=31 // pred_fallthru
          _
        %s569 = sand.u32 %s109, 1
        %s570 = scalar_lea.sflag [#allocation5], %s569
        %s571 = sand.u32 %s109, 1
        %s572 = smul.addr %s571, 8
        %s573 = scalar_lea.vmem [#allocation9], %s572
        // Predicated region
        $region53: #{poswise_ffn.1} parent=31 // pred_check
          %p574 = pneg %p119
        $region54: #{poswise_ffn.1} parent=31 // pred_check_branch
          %576 = sbr.rel (%p574) target = $region56
        $region55: #{poswise_ffn.1} parent=31 // pred_region
          %s578 = ssub.s32 128, 128
          %579 = vsyncadd %s570, %s578
          %s580 = smul.addr %s25, 128
          %s581 = scalar_lea.hbm %s3, %s580
          %s583 = sshll.u32 %s573, 4
          %s584 = int_to_ptr.vmem [resolvable:$true] %s583
          %586 = dma.vmem_to_hbm [thread:$0]  %s584, 128, %s581, %s570
        $region56: #{poswise_ffn.1} parent=31 // pred_fallthru
          _
      $region32: #{poswise_ffn.1} parent=5 // pred_fallthru
        _
      %p587 = scmp.le.s32.totalorder 2, %s16
      // Predicated region
      $region57: #{poswise_ffn.1} parent=5 // pred_check
        %p588 = pneg %p587
      $region58: #{poswise_ffn.1} parent=5 // pred_check_branch
        %590 = sbr.rel (%p588) target = $region60
      $region59: #{poswise_ffn.1} parent=5 // pred_region
        %s591 = ssub.s32 %s16, 2
        // Predicated region
        $region61: #{poswise_ffn.1} parent=59 // pred_check
          %p592 = pneg %p125
        $region62: #{poswise_ffn.1} parent=59 // pred_check_branch
          %594 = sbr.rel (%p592) target = $region64
        $region63: #{poswise_ffn.1} parent=59 // pred_region
          %s595 = sand.u32 %s110, 1
          %s596 = scalar_lea.sflag [#allocation5], %s595
          %s597 = sand.u32 %s110, 1
          %s598 = smul.addr %s597, 8
          %s599 = scalar_lea.vmem [#allocation9], %s598
          %600 = dma.done %s596, 128
        $region64: #{poswise_ffn.1} parent=59 // pred_fallthru
          _
      $region60: #{poswise_ffn.1} parent=5 // pred_fallthru
        _
    $region6: #{poswise_ffn.1} parent=1 // loop_footer
      %s20 = sadd.s32 1, %s16
    $region7: #{poswise_ffn.1} parent=1 // loop_footer_branch
      %15 = sbr.rel target = $region3
    $region8: #{poswise_ffn.1} parent=1 // loop_exit
      _
    %601 = vsyncpa [#allocation4], 1
    %s602 = scalar_lea.sflag [#allocation4], 1
    %603 = vsyncpa %s602, 1
    %604 = vsyncpa [#allocation7], 1
    %605 = vsyncpa [#allocation5], 1
    %s606 = scalar_lea.sflag [#allocation5], 1
    %607 = vsyncpa %s606, 1

</llo_original>
